<compile_context>
chip_gen: v5e
topology: v5e:2x2
jax: 0.10.0
libtpu: 0.0.40
codegen_flags: <defaults>
</compile_context>

<pallas_src>
import functools

import jax
import jax.numpy as jnp
from jax import lax
from jax.experimental import pallas as pl
from jax.experimental.pallas import tpu as pltpu


# ---------------------------------------------------------------------------
# One-time probe: which rotation convention does pltpu.roll use on this build?
# ---------------------------------------------------------------------------
@functools.lru_cache(maxsize=None)
def _pltpu_roll_is_forward() -> bool:
    """True iff pltpu.roll follows jnp.roll: out[i] = x[(i - shift) % n]."""
    def probe(x_ref, o_ref):
        o_ref[...] = pltpu.roll(x_ref[...], 1, axis=0)

    with jax.ensure_compile_time_eval():
        x = jnp.broadcast_to(jnp.arange(8, dtype=jnp.float32)[:, None], (8, 128))
        out = pl.pallas_call(
            probe, out_shape=jax.ShapeDtypeStruct((8, 128), jnp.float32))(x)
        return bool(out[1, 0] == 0.0)


# ---------------------------------------------------------------------------
# Kernel
# ---------------------------------------------------------------------------
def _make_kernel(trc, w_in, cx, cy, roll_forward):
    c2 = 2 * cy

    def shift_for(delta, n):
        # roll shift such that result[i] = x[(i + delta) % n]
        return (-delta) % n if roll_forward else delta % n

    def kernel(xp_ref, xm_ref, xn_ref, w_ref, y_ref, o_ref):
        f32 = jnp.float32
        wd = w_ref[...]                                     # (Cx, 2*Cy)

        def conv_wup(x_rows):
            """1x1 conv + W-direction bilinear 2x -> (R, W, 2*Cy) f32.

            lanes [0, Cy)   -> out col 2j   = 0.25*z[j-1] + 0.75*z[j]
            lanes [Cy, 2Cy) -> out col 2j+1 = 0.75*z[j]   + 0.25*z[j+1]
            (edge-clamped; matches align_corners=False.)
            """
            r = x_rows.shape[0]
            rw = r * w_in
            zd = jnp.dot(x_rows.reshape(rw, cx), wd,
                         preferred_element_type=f32)        # (rw, 2Cy); halves == z
            left = pltpu.roll(zd, shift_for(-1, rw), axis=0).reshape(r, w_in, c2)
            right = pltpu.roll(zd, shift_for(+1, rw), axis=0).reshape(r, w_in, c2)
            zd3 = zd.reshape(r, w_in, c2)
            col = lax.broadcasted_iota(jnp.int32, (r, w_in, c2), 1)
            lane = lax.broadcasted_iota(jnp.int32, (r, w_in, c2), 2)
            left = jnp.where(col == 0, zd3, left)           # clamp at j == 0
            right = jnp.where(col == w_in - 1, zd3, right)  # clamp at j == W-1
            nbr = jnp.where(lane < cy, left, right)
            return 0.75 * zd3 + 0.25 * nbr

        zw_m = conv_wup(xm_ref[...])                        # (trc, W, 2Cy)
        zw_p = conv_wup(xp_ref[...])                        # (1,  W, 2Cy)  row above (clamped)
        zw_n = conv_wup(xn_ref[...])                        # (1,  W, 2Cy)  row below (clamped)

        # H-direction neighbors: a shift by one input row is a sublane roll by
        # w_in on the flattened (trc*W, 2Cy) view; rows 0 / trc-1 take the halo.
        flat_n = trc * w_in
        zw_m2 = zw_m.reshape(flat_n, c2)
        up = pltpu.roll(zw_m2, shift_for(-w_in, flat_n), axis=0).reshape(trc, w_in, c2)
        dn = pltpu.roll(zw_m2, shift_for(+w_in, flat_n), axis=0).reshape(trc, w_in, c2)
        row = lax.broadcasted_iota(jnp.int32, (trc, w_in, c2), 0)
        up = jnp.where(row == 0, zw_p, up)
        dn = jnp.where(row == trc - 1, zw_n, dn)

        # Skip-add + direct even/odd row stores (lane-dense, 2*Cy wide).
        y0 = y_ref[:, 0:1].reshape(trc, w_in, c2)
        y1 = y_ref[:, 1:2].reshape(trc, w_in, c2)
        even = 0.25 * up + 0.75 * zw_m + y0                  # output rows 2k
        odd = 0.75 * zw_m + 0.25 * dn + y1                   # output rows 2k+1
        o_ref[:, 0:1] = even.reshape(trc, 1, w_in, c2).astype(o_ref.dtype)
        o_ref[:, 1:2] = odd.reshape(trc, 1, w_in, c2).astype(o_ref.dtype)

    return kernel


# ---------------------------------------------------------------------------
# Tile picking / VMEM budgeting (generation-aware)
# ---------------------------------------------------------------------------
def _kernel_vmem_footprint(trc, W, Cx, Cy, itemsize):
    c2 = 2 * Cy
    blocks = ((trc + 2) * W * Cx + Cx * c2 + 2 * trc * 2 * W * c2) * itemsize
    temps = 12 * trc * W * c2 * 4 + 8 * W * c2 * 4           # f32 intermediates (rough)
    return 2 * blocks + temps                                # double-buffered blocks


def _pick_row_tile(B, H, W, Cx, Cy, itemsize, max_tile=512):
    try:
        info = pltpu.get_tpu_info()
        vmem = int(getattr(info, "vmem_capacity_bytes", 0)) or 64 * 2**20
    except Exception:
        vmem = 64 * 2**20
    budget = min(vmem // 3, 28 * 2**20)
    best = 1
    for trc in range(1, min(H, max_tile) + 1):
        if H % trc:
            continue
        if B * (H // trc) < 2 and trc > 1:
            continue  # keep >= 2 grid steps so both v7x TensorCores get work
        if _kernel_vmem_footprint(trc, W, Cx, Cy, itemsize) <= budget:
            best = trc
    return best


def _vmem_limit_bytes(trc, W, Cx, Cy, itemsize):
    fp = _kernel_vmem_footprint(trc, W, Cx, Cy, itemsize)
    return int(min(max(2 * fp, 32 * 2**20), 64 * 2**20))


# ---------------------------------------------------------------------------
# Wrapper
# ---------------------------------------------------------------------------
def skip_upsample(x, y, weight, *, row_tile=None):
    """Fused bilinear 2x upsample (align_corners=False) + 1x1 conv (no bias) + skip add.

    x:      (B, H, W, Cx)     channels-last map to upsample  (Cx = torch out_channels)
    y:      (B, 2H, 2W, Cy)   skip connection                (Cy = torch in_channels)
    weight: (Cx, Cy)          1x1 conv weight, transposed vs torch's (Cy, Cx, 1, 1)
    returns (B, 2H, 2W, Cy)
    """
    B, H, W, Cx = x.shape
    Cy = weight.shape[1]
    Ho, Wo = 2 * H, 2 * W
    assert y.shape == (B, Ho, Wo, Cy), (y.shape, (B, Ho, Wo, Cy))
    assert W % 8 == 0, "W must be a multiple of 8 (layout-free reshapes)"
    assert (2 * Cy) % 128 == 0, "2*Cy must be a multiple of 128 (lane-dense stores)"
    # TODO(synk): channel/width-pad instead of asserting for odd shapes.

    itemsize = max(jnp.dtype(x.dtype).itemsize, jnp.dtype(y.dtype).itemsize)
    trc = row_tile if row_tile is not None else _pick_row_tile(B, H, W, Cx, Cy, itemsize)
    assert H % trc == 0, (H, trc)
    n_t = H // trc
    c2 = 2 * Cy

    kernel = _make_kernel(trc, W, Cx, Cy, _pltpu_roll_is_forward())

    # Doubled 1x1 weight [W | W]: matmul output is already 2*Cy lanes wide.
    wd = jnp.concatenate([weight, weight], axis=1)           # (Cx, 2*Cy)

    # Free row-major view: (B, 2H, 2W, Cy) == (B, H, 2, W, 2*Cy).
    y5 = y.reshape(B, H, 2, W, c2)

    out5 = pl.pallas_call(
        kernel,
        out_shape=jax.ShapeDtypeStruct((B, H, 2, W, c2), y.dtype),
        grid_spec=pltpu.PrefetchScalarGridSpec(
            num_scalar_prefetch=0,
            grid=(B, n_t),
            in_specs=[
                # previous input row of this tile (clamped at the top edge)
                pl.BlockSpec((None, 1, W, Cx),
                             lambda b, t: (b, jnp.maximum(t * trc - 1, 0), 0, 0)),
                # the tile's trc input rows
                pl.BlockSpec((None, trc, W, Cx), lambda b, t: (b, t, 0, 0)),
                # next input row of this tile (clamped at the bottom edge)
                pl.BlockSpec((None, 1, W, Cx),
                             lambda b, t: (b, jnp.minimum(t * trc + trc, H - 1), 0, 0)),
                # doubled 1x1 weight (constant block)
                pl.BlockSpec((Cx, c2), lambda b, t: (0, 0)),
                # skip connection, viewed as (rows, parity, W, 2*Cy)
                pl.BlockSpec((None, trc, 2, W, c2), lambda b, t: (b, t, 0, 0, 0)),
            ],
            out_specs=pl.BlockSpec((None, trc, 2, W, c2),
                                   lambda b, t: (b, t, 0, 0, 0)),
        ),
        compiler_params=pltpu.CompilerParams(
            dimension_semantics=("parallel", "parallel"),
            vmem_limit_bytes=_vmem_limit_bytes(trc, W, Cx, Cy, itemsize)),
    )(x, x, x, wd, y5)

    return out5.reshape(B, Ho, Wo, Cy)


# ---------------------------------------------------------------------------
# Plain-JAX reference (original torch op order: upsample -> conv -> add).
# ---------------------------------------------------------------------------
def _bilinear_up2x_1d(a, axis):
    """PyTorch Upsample(scale_factor=2, bilinear, align_corners=False), one axis."""
    n = a.shape[axis]
    prev = jnp.concatenate([lax.slice_in_dim(a, 0, 1, axis=axis),
                            lax.slice_in_dim(a, 0, n - 1, axis=axis)], axis=axis)
    nxt = jnp.concatenate([lax.slice_in_dim(a, 1, n, axis=axis),
                           lax.slice_in_dim(a, n - 1, n, axis=axis)], axis=axis)
    even = 0.25 * prev + 0.75 * a
    odd = 0.75 * a + 0.25 * nxt
    out = jnp.stack([even, odd], axis=axis + 1)
    shape = list(a.shape)
    shape[axis] = 2 * n
    return out.reshape(shape)


def skip_upsample_ref(x, y, weight):
    up = _bilinear_up2x_1d(_bilinear_up2x_1d(x, 1), 2)        # (B, 2H, 2W, Cx)
    z = jnp.einsum("bhwc,cd->bhwd", up, weight,
                   precision=jax.lax.Precision.HIGHEST)
    return z + y


if __name__ == "__main__":
    # SkipUpSample(in_channels=64, out_channels=128):
    #   x: (B, H, W, out_channels) --2x up--> conv 128->64 --> + y
    #   y: (B, 2H, 2W, in_channels)
    in_channels, out_channels = 64, 128
    B, H, W = 2, 16, 16

    kx, ky, kw = jax.random.split(jax.random.PRNGKey(0), 3)
    x = jax.random.normal(kx, (B, H, W, out_channels), jnp.float32)
    y = jax.random.normal(ky, (B, 2 * H, 2 * W, in_channels), jnp.float32)
    # torch Conv2d(out_channels, in_channels, 1, bias=False).weight has shape
    # (in_channels, out_channels, 1, 1); stored here transposed as (Cx, Cy).
    weight = (jax.random.normal(kw, (out_channels, in_channels), jnp.float32)
              / jnp.sqrt(jnp.float32(out_channels)))

    _pltpu_roll_is_forward()   # warm the one-time roll-direction probe outside jit

    ref = skip_upsample_ref(x, y, weight)

    # row_tile=4 -> grid (2, 4): exercises interior tiles and both clamped halos.
    fwd = jax.jit(functools.partial(skip_upsample, row_tile=4))
    out = fwd(x, y, weight)
    jax.block_until_ready(out)
    assert out.shape == (B, 2 * H, 2 * W, in_channels), out.shape
    err = float(jnp.max(jnp.abs(out - ref)))
    assert err < 2e-2, f"max abs error vs reference (row_tile=4): {err}"

    # Generation-aware tile-picker path (larger tile, single row tile here).
    out2 = skip_upsample(x, y, weight)
    jax.block_until_ready(out2)
    err2 = float(jnp.max(jnp.abs(out2 - ref)))
    assert err2 < 2e-2, f"max abs error vs reference (auto tile): {err2}"

    print("KERNEL_OK")
</pallas_src>

<mosaic_0001>
module attributes {stable_mosaic.version = 11 : i64} {
  func.func @probe(%arg0: memref<8x128xf32, #tpu.memory_space<vmem>>, %arg1: memref<8x128xf32, #tpu.memory_space<vmem>>) attributes {dimension_semantics = [], scalar_prefetch = 0 : i64, scratch_operands = 0 : i64, tpu.core_type = #tpu.core_type<tc>} {
    %c0 = arith.constant 0 : index
    %c0_0 = arith.constant 0 : index
    %0 = vector.load %arg0[%c0, %c0_0] : memref<8x128xf32, #tpu.memory_space<vmem>>, vector<8x128xf32>
    %c1_i32 = arith.constant 1 : i32
    %1 = tpu.dynamic_rotate %0 by %c1_i32 dim 0 : vector<8x128xf32>, i32 -> vector<8x128xf32>
    %c0_1 = arith.constant 0 : index
    %c0_2 = arith.constant 0 : index
    %2 = vector.load %arg1[%c0_1, %c0_2] : memref<8x128xf32, #tpu.memory_space<vmem>>, vector<8x128xf32>
    tpu.vector_store %arg1[%c0_1, %c0_2], %1 {strides = array<i32>} : memref<8x128xf32, #tpu.memory_space<vmem>>, vector<8x128xf32>,
    return
  }
}

</mosaic_0001>

<llo_original>
// kernel: tpu_custom_call.1
$region0: #{tpu_custom_call.1}
  #allocation0 [shape = 'u32[]', space=smem, size = 0x4, offset = 0x4, fixed_abs, tag = 'smem constant byte address 0x4 - core index']
  #allocation1 [shape = 'u32[72,128]{1,0:T(1,128)}', space=vmem, size = 0x9000, scoped, tag = 'internal scratch']
  %s0 = inlined_call_operand.hbm [shape: f32[8,128], index: 0, kind: input, shape index: {}]
  %s1 = inlined_call_operand.hbm [shape: f32[8,128], index: 1, kind: output, shape index: {}]
  %s2 = sld [smem:[#allocation0]]
  $region18: #{tpu_custom_call.1} parent=0
    _
  %s4 = ssub.s32 1, %s2
  %s5 = scalar_select 0, %s4, %s2
  $region1: #{tpu_custom_call.1} parent=0
    #allocation2 [shape = 'u8[4096]{0}', space=vmem, size = 0x1000, scoped, tag = 'input window, operand 0, single buffered']
    #allocation3 [shape = 's32[1]{0}', space=sflag, size = 0x4, scoped, tag = 'scoped memory for tpu_custom_call.1']
    #allocation4 [shape = 's32[1]{0}', space=sflag, size = 0x4, scoped, tag = 'scoped memory for tpu_custom_call.1']
    #allocation5 [shape = 'u8[4096]{0}', space=vmem, size = 0x1000, scoped, tag = 'output window, operand 0, single buffered']
    %6 = vsyncpa [#allocation3], 0
    %7 = vsyncpa [#allocation4], 0
    // Predicated region
    $region2: #{tpu_custom_call.1} parent=1 // pred_check
      _
    $region3: #{tpu_custom_call.1} parent=1 // pred_check_branch
      %9 = sbr.rel (0) target = $region5
    $region4: #{tpu_custom_call.1} parent=1 // pred_region
      %11 = vsyncadd [#allocation3], 0
      %s13 = sshll.u32 %s0, 4
      %s14 = int_to_ptr.hbm [resolvable:$true] %s13
      %s15 = sshll.u32 [#allocation2], 4
      %s16 = int_to_ptr.vmem [resolvable:$true] %s15
      %18 = dma.hbm_to_vmem [thread:$0]  %s14, 128, %s16, [#allocation3]
    $region5: #{tpu_custom_call.1} parent=1 // pred_fallthru
      _
    // Predicated region
    $region6: #{tpu_custom_call.1} parent=1 // pred_check
      _
    $region7: #{tpu_custom_call.1} parent=1 // pred_check_branch
      %20 = sbr.rel (0) target = $region9
    $region8: #{tpu_custom_call.1} parent=1 // pred_region
      %22 = dma.done [#allocation3], 128
    $region9: #{tpu_custom_call.1} parent=1 // pred_fallthru
      _
    %v23 = vld [vmem:[#allocation2] sm:$0xff]
    %v24 = vrot.slane %v23, 7
    %25 = vst [vmem:[#allocation5] sm:$0xff] %v24
    // Predicated region
    $region10: #{tpu_custom_call.1} parent=1 // pred_check
      _
    $region11: #{tpu_custom_call.1} parent=1 // pred_check_branch
      %27 = sbr.rel (0) target = $region13
    $region12: #{tpu_custom_call.1} parent=1 // pred_region
      %29 = vsyncadd [#allocation4], 0
      %s31 = sshll.u32 [#allocation5], 4
      %s32 = int_to_ptr.vmem [resolvable:$true] %s31
      %s33 = sshll.u32 %s1, 4
      %s34 = int_to_ptr.hbm [resolvable:$true] %s33
      %36 = dma.vmem_to_hbm [thread:$0]  %s32, 128, %s34, [#allocation4]
    $region13: #{tpu_custom_call.1} parent=1 // pred_fallthru
      _
    // Predicated region
    $region14: #{tpu_custom_call.1} parent=1 // pred_check
      _
    $region15: #{tpu_custom_call.1} parent=1 // pred_check_branch
      %38 = sbr.rel (0) target = $region17
    $region16: #{tpu_custom_call.1} parent=1 // pred_region
      %40 = dma.done [#allocation4], 128
    $region17: #{tpu_custom_call.1} parent=1 // pred_fallthru
      _
    %41 = vsyncpa [#allocation3], 1
    %42 = vsyncpa [#allocation4], 1

</llo_original>
